<compile_context>
chip_gen: v7x
topology: tpu7x:2x2x1
jax: 0.10.0
libtpu: 0.0.40
codegen_flags: <defaults>
</compile_context>

<pallas_src>
import functools
from typing import List, Tuple

import numpy as np
import jax
import jax.numpy as jnp
from jax.experimental import pallas as pl
from jax.experimental.pallas import tpu as pltpu

_LANE = 128                    # lane (last-dim) granularity
_MAX_TILE_ROWS = 4096          # hard cap on rows per grid step
_NARROW_MAX_LEN = 64           # max_len <= this -> unpadded "narrow" kernel
_INT16_VOCAB_LIMIT = 1 << 15   # vocab ids must fit in int16


def _round_up(x: int, m: int) -> int:
    return ((x + m - 1) // m) * m


def _cdiv(a: int, b: int) -> int:
    return -(-a // b)


def _vmem_budget_bytes() -> Tuple[int, int]:
    """Returns (per-call working budget, vmem_limit_bytes), generation-aware."""
    try:
        cap = int(getattr(pltpu.get_tpu_info(), "vmem_capacity_bytes", 0) or 0)
    except Exception:
        cap = 0
    if cap <= 0:
        cap = 64 * 1024 * 1024          # conservative fallback: v7x per-TC VMEM
    # v5e/v6e (128 MiB) -> limit 64 MiB / budget 48 MiB; v7x (64 MiB) -> 32 / 24.
    limit = max(16 * 1024 * 1024, min(cap // 2, 64 * 1024 * 1024))
    return (limit * 3) // 4, limit


# --------------------------------------------------------------------------
# Simple deterministic vocab (the module's __init__ only needs __getitem__ /
# __call__ semantics).  No file loading -- built in-script.
# --------------------------------------------------------------------------
class Vocab:
    def __init__(self, words):
        self._stoi = {"<PAD>": 0, "<EDGE>": 1, "<UNK>": 2}
        for w in words:
            self._stoi.setdefault(w, len(self._stoi))

    def __getitem__(self, tok: str) -> int:
        return self._stoi.get(tok, self._stoi["<UNK>"])

    def __call__(self, tokens: List[str]) -> List[int]:
        return [self[t] for t in tokens]

    def __len__(self):
        return len(self._stoi)


# --------------------------------------------------------------------------
# Kernels.  Semantics (per row i, sentence length len_i):
#   X[i, 0]           = edge
#   X[i, 1:len_i+1]   = tokens[i, 0:len_i]
#   X[i, len_i+1:]    = pad
#   Y[i, 0:len_i-1]   = tokens[i, 0:len_i-1]
#   Y[i, len_i-1]     = edge        (reference overwrites the last real token)
#   Y[i, len_i:]      = pad
# Compute in int32 (VPU selects are free; kernel is HBM-bandwidth bound) and
# cast to the storage dtype (int16 when the vocab fits) only at the store.
# --------------------------------------------------------------------------
def _tok_kernel_wide(tok_ref, len_ref, x_ref, y_ref, *, edge_index, pad_index):
    toks = tok_ref[...].astype(jnp.int32)     # (TILE_N, L_pad)
    lens = len_ref[...]                        # (TILE_N, 1) int32
    tn, lp = toks.shape
    col = jax.lax.broadcasted_iota(jnp.int32, (tn, lp), 1)
    edge = jnp.int32(edge_index)
    pad = jnp.int32(pad_index)
    # shifted[i, c] = toks[i, c-1]; the wrap into column 0 is always
    # overwritten by <EDGE>.  XLU roll is free (VPU/ld-st are the busy units).
    shifted = pltpu.roll(toks, shift=1, axis=1)
    x = jnp.where(col == 0, edge, jnp.where(col <= lens, shifted, pad))
    y = jnp.where(col < lens - 1, toks, jnp.where(col == lens - 1, edge, pad))
    x_ref[...] = x.astype(x_ref.dtype)
    y_ref[...] = y.astype(y_ref.dtype)


def _tok_kernel_narrow(tok_ref, tok_sh_ref, len_ref, x_ref, y_ref, *,
                       edge_index, pad_index):
    # Narrow path (last dim == max_len, not lane-padded): the +1 column shift
    # is packed on the host as a second narrow grid, so the kernel stays
    # purely element-wise (no lane data movement at all).
    toks = tok_ref[...].astype(jnp.int32)
    shifted = tok_sh_ref[...].astype(jnp.int32)
    lens = len_ref[...]
    tn, lp = toks.shape
    col = jax.lax.broadcasted_iota(jnp.int32, (tn, lp), 1)
    edge = jnp.int32(edge_index)
    pad = jnp.int32(pad_index)
    x = jnp.where(col == 0, edge, jnp.where(col <= lens, shifted, pad))
    y = jnp.where(col < lens - 1, toks, jnp.where(col == lens - 1, edge, pad))
    x_ref[...] = x.astype(x_ref.dtype)
    y_ref[...] = y.astype(y_ref.dtype)


# --------------------------------------------------------------------------
# Tokenizer wrapper (mirrors the PyTorch module's forward / get_tensors).
# --------------------------------------------------------------------------
class Tokenizer:
    def __init__(self, vocab: Vocab):
        self.vocab = vocab
        self.edge_index = vocab["<EDGE>"]
        self.pad_index = vocab["<PAD>"]
        self.unk_index = vocab["<UNK>"]

    def get_tensors(self, data) -> Tuple[jax.Array, jax.Array]:
        # NOTE: empty sentences (len == 0) are undefined in the PyTorch
        # reference (stale loop variable); here they produce an all-<PAD> Y
        # row and X = [<EDGE>, <PAD>, ...].
        n = len(data)
        max_len = max(len(d) for d in data) + 1

        use_i16 = len(self.vocab) < _INT16_VOCAB_LIMIT
        dt_np = np.int16 if use_i16 else np.int32
        dt_j = jnp.int16 if use_i16 else jnp.int32
        itemsize = 2 if use_i16 else 4
        sublane = 16 if use_i16 else 8

        narrow = max_len <= _NARROW_MAX_LEN
        l_pad = max_len if narrow else _round_up(max_len, _LANE)

        # ---- balanced row tiling against a generation-aware VMEM budget ----
        budget, vmem_limit = _vmem_budget_bytes()
        n_r = _round_up(n, sublane)
        n_grids = 4 if narrow else 3             # token grid(s) + X + Y
        # per-row VMEM: data grids + lens (a (tile,1) int32 block occupies a
        # full 128-lane column), times 2 for double buffering.
        bytes_per_row = (n_grids * l_pad * itemsize + _LANE * 4) * 2
        tile_cap = max(sublane,
                       min(_MAX_TILE_ROWS,
                           (budget // bytes_per_row) // sublane * sublane))
        # Force >= 2 tiles when possible so "parallel" shards over both v7x TCs.
        num_tiles = max(_cdiv(n_r, tile_cap), 2 if n_r >= 2 * sublane else 1)
        tile_n = _round_up(_cdiv(n_r, num_tiles), sublane)
        n_pad = num_tiles * tile_n
        grid = (num_tiles,)

        # ---- vectorized host-side packing (per-sentence, not per-token) ----
        lens_np = np.array([len(d) for d in data], dtype=np.int32)
        total = int(lens_np.sum())
        toks = np.full((n_pad, l_pad), self.pad_index, dt_np)
        if total:
            flat = np.concatenate(
                [np.asarray(d, dtype=dt_np) for d in data if len(d) > 0])
            mask = np.arange(l_pad, dtype=np.int32)[None, :] < lens_np[:, None]
            toks[:n][mask] = flat      # row-major boolean assignment == ragged order
        lens = np.zeros((n_pad, 1), np.int32)
        lens[:n, 0] = lens_np

        common = dict(edge_index=int(self.edge_index),
                      pad_index=int(self.pad_index))
        row_spec = pl.BlockSpec((tile_n, l_pad), lambda i: (i, 0))
        len_spec = pl.BlockSpec((tile_n, 1), lambda i: (i, 0))
        out_shape = (jax.ShapeDtypeStruct((n_pad, l_pad), dt_j),
                     jax.ShapeDtypeStruct((n_pad, l_pad), dt_j))
        out_bytes = 2 * n_pad * l_pad * itemsize

        if narrow:
            toks_shift = np.full((n_pad, l_pad), self.pad_index, dt_np)
            if l_pad > 1:
                toks_shift[:, 1:] = toks[:, :-1]
            kernel = functools.partial(_tok_kernel_narrow, **common)
            in_specs = [row_spec, row_spec, len_spec]
            args = (jnp.asarray(toks), jnp.asarray(toks_shift), jnp.asarray(lens))
            in_bytes = 2 * n_pad * l_pad * itemsize + lens.nbytes
        else:
            kernel = functools.partial(_tok_kernel_wide, **common)
            in_specs = [row_spec, len_spec]
            args = (jnp.asarray(toks), jnp.asarray(lens))
            in_bytes = n_pad * l_pad * itemsize + lens.nbytes

        x_pad, y_pad = pl.pallas_call(
            kernel,
            out_shape=out_shape,
            grid_spec=pltpu.PrefetchScalarGridSpec(
                num_scalar_prefetch=0,
                grid=grid,
                in_specs=in_specs,
                out_specs=[row_spec, row_spec],
            ),
            compiler_params=pltpu.CompilerParams(
                dimension_semantics=("parallel",),
                vmem_limit_bytes=int(vmem_limit),
            ),
            cost_estimate=pl.CostEstimate(
                flops=10 * n_pad * l_pad,
                transcendentals=0,
                bytes_accessed=int(in_bytes + out_bytes),
            ),
        )(*args)

        # TODO(synk): overlap host packing / H2D of batch k+1 with the device
        # kernel for batch k (host side dominates end-to-end for real workloads).
        x = x_pad[:n, :max_len].astype(jnp.int32)
        y = y_pad[:n, :max_len].astype(jnp.int32)
        return x, y

    def forward(self, text: List[str]) -> Tuple[jax.Array, jax.Array]:
        split = [sentence.split() for sentence in text]
        tokenized = [self.vocab(sentence) for sentence in split]
        return self.get_tensors(tokenized)

    __call__ = forward


# --------------------------------------------------------------------------
# Pure-numpy reference mirroring the original PyTorch get_tensors exactly
# (including the Y[i, j] = edge overwrite of the last real token).
# --------------------------------------------------------------------------
def _ref_get_tensors(data, edge, pad):
    max_len = max(len(d) for d in data) + 1
    n = len(data)
    X = np.full((n, max_len), pad, np.int64)
    Y = np.full((n, max_len), pad, np.int64)
    for i in range(n):
        X[i, 0] = edge
        for j in range(len(data[i])):
            X[i, j + 1] = data[i][j]
            Y[i, j] = data[i][j]
        Y[i, j] = edge
    return X, Y


def _make_text(words, lengths, key):
    ids = np.asarray(jax.random.randint(key, (int(sum(lengths)),), 0, len(words)))
    text, off = [], 0
    for L in lengths:
        text.append(" ".join(words[i] for i in ids[off:off + L]))
        off += L
    return text


def _check(tokenizer, text):
    X, Y = tokenizer(text)
    X = jax.block_until_ready(X)
    Y = jax.block_until_ready(Y)
    tok_lists = [tokenizer.vocab(s.split()) for s in text]
    X_ref, Y_ref = _ref_get_tensors(tok_lists, tokenizer.edge_index,
                                    tokenizer.pad_index)
    assert X.shape == X_ref.shape and Y.shape == Y_ref.shape
    np.testing.assert_array_equal(np.asarray(X, dtype=np.int64), X_ref)
    np.testing.assert_array_equal(np.asarray(Y, dtype=np.int64), Y_ref)


if __name__ == "__main__":
    key = jax.random.PRNGKey(0)
    k1, k2, k3 = jax.random.split(key, 3)

    # Test 1: small vocab (int16 path) + short sentences (narrow kernel).
    words = [f"w{i}" for i in range(10)]
    tok_small = Tokenizer(Vocab(words))
    _check(tok_small, _make_text(words, [3, 5, 2], k1))

    # Test 2: small vocab + long sentences (wide, 128-lane-padded roll kernel).
    _check(tok_small, _make_text(words, [70, 91, 65, 80], k2))

    # Test 3: large vocab (>= 32768 -> int32 path), short sentences.
    big_words = [f"v{i}" for i in range(1 << 15)]
    tok_big = Tokenizer(Vocab(big_words))
    _check(tok_big, _make_text(big_words, [4, 7, 1], k3))

    print("KERNEL_OK")
</pallas_src>

<mosaic_0001>
module attributes {stable_mosaic.version = 11 : i64} {
  func.func @_tok_kernel_narrow(%arg0: i32, %arg1: memref<16x6xi16, #tpu.memory_space<vmem>>, %arg2: memref<16x6xi16, #tpu.memory_space<vmem>>, %arg3: memref<16x1xi32, #tpu.memory_space<vmem>>, %arg4: memref<16x6xi16, #tpu.memory_space<vmem>>, %arg5: memref<16x6xi16, #tpu.memory_space<vmem>>) attributes {dimension_semantics = [#tpu.dimension_semantics<parallel>], iteration_bounds = array<i64: 1>, scalar_prefetch = 0 : i64, scratch_operands = 0 : i64, tpu.core_type = #tpu.core_type<tc>, window_params = [{transform_indices = @transform_0, window_bounds = array<i64: 16, 6>}, {transform_indices = @transform_1, window_bounds = array<i64: 16, 6>}, {transform_indices = @transform_2, window_bounds = array<i64: 16, 1>}, {transform_indices = @transform_3, window_bounds = array<i64: 16, 6>}, {transform_indices = @transform_4, window_bounds = array<i64: 16, 6>}]} {
    %c0 = arith.constant 0 : index
    %c0_0 = arith.constant 0 : index
    %0 = vector.load %arg1[%c0, %c0_0] : memref<16x6xi16, #tpu.memory_space<vmem>>, vector<16x6xi16>
    %1 = arith.extsi %0 : vector<16x6xi16> to vector<16x6xi32>
    %c0_1 = arith.constant 0 : index
    %c0_2 = arith.constant 0 : index
    %2 = vector.load %arg2[%c0_1, %c0_2] : memref<16x6xi16, #tpu.memory_space<vmem>>, vector<16x6xi16>
    %3 = arith.extsi %2 : vector<16x6xi16> to vector<16x6xi32>
    %c0_3 = arith.constant 0 : index
    %c0_4 = arith.constant 0 : index
    %4 = vector.load %arg3[%c0_3, %c0_4] : memref<16x1xi32, #tpu.memory_space<vmem>>, vector<16x1xi32>
    %5 = tpu.iota {dimensions = array<i32: 1>} : vector<16x6xi32>
    %c0_i32 = arith.constant 0 : i32
    %6 = vector.broadcast %c0_i32 : i32 to vector<16x6xi32>
    %7 = arith.cmpi eq, %5, %6 : vector<16x6xi32>
    %8 = vector.broadcast %4 : vector<16x1xi32> to vector<16x6xi32>
    %9 = arith.cmpi sle, %5, %8 : vector<16x6xi32>
    %c0_i32_5 = arith.constant 0 : i32
    %10 = vector.broadcast %c0_i32_5 : i32 to vector<16x6xi32>
    %11 = arith.select %9, %3, %10 : vector<16x6xi1>, vector<16x6xi32>
    %c1_i32 = arith.constant 1 : i32
    %12 = vector.broadcast %c1_i32 : i32 to vector<16x6xi32>
    %13 = arith.select %7, %12, %11 : vector<16x6xi1>, vector<16x6xi32>
    %c1_i32_6 = arith.constant 1 : i32
    %14 = vector.broadcast %c1_i32_6 : i32 to vector<16x1xi32>
    %15 = arith.subi %4, %14 : vector<16x1xi32>
    %16 = vector.broadcast %15 : vector<16x1xi32> to vector<16x6xi32>
    %17 = arith.cmpi slt, %5, %16 : vector<16x6xi32>
    %c1_i32_7 = arith.constant 1 : i32
    %18 = vector.broadcast %c1_i32_7 : i32 to vector<16x1xi32>
    %19 = arith.subi %4, %18 : vector<16x1xi32>
    %20 = vector.broadcast %19 : vector<16x1xi32> to vector<16x6xi32>
    %21 = arith.cmpi eq, %5, %20 : vector<16x6xi32>
    %c1_i32_8 = arith.constant 1 : i32
    %c0_i32_9 = arith.constant 0 : i32
    %22 = vector.broadcast %c1_i32_8 : i32 to vector<16x6xi32>
    %23 = vector.broadcast %c0_i32_9 : i32 to vector<16x6xi32>
    %24 = arith.select %21, %22, %23 : vector<16x6xi1>, vector<16x6xi32>
    %25 = arith.select %17, %1, %24 : vector<16x6xi1>, vector<16x6xi32>
    %26 = arith.trunci %13 : vector<16x6xi32> to vector<16x6xi16>
    %c0_10 = arith.constant 0 : index
    %c0_11 = arith.constant 0 : index
    %27 = vector.load %arg4[%c0_10, %c0_11] : memref<16x6xi16, #tpu.memory_space<vmem>>, vector<16x6xi16>
    tpu.vector_store %arg4[%c0_10, %c0_11], %26 {strides = array<i32>} : memref<16x6xi16, #tpu.memory_space<vmem>>, vector<16x6xi16>,
    %28 = arith.trunci %25 : vector<16x6xi32> to vector<16x6xi16>
    %c0_12 = arith.constant 0 : index
    %c0_13 = arith.constant 0 : index
    %29 = vector.load %arg5[%c0_12, %c0_13] : memref<16x6xi16, #tpu.memory_space<vmem>>, vector<16x6xi16>
    tpu.vector_store %arg5[%c0_12, %c0_13], %28 {strides = array<i32>} : memref<16x6xi16, #tpu.memory_space<vmem>>, vector<16x6xi16>,
    return
  }
  func.func @transform_0(%arg0: i32) -> (i32, i32) {
    %c0_i32 = arith.constant 0 : i32
    %c0_i32_0 = arith.constant 0 : i32
    return %arg0, %c0_i32 : i32, i32
  }
  func.func @transform_1(%arg0: i32) -> (i32, i32) {
    %c0_i32 = arith.constant 0 : i32
    %c0_i32_0 = arith.constant 0 : i32
    return %arg0, %c0_i32 : i32, i32
  }
  func.func @transform_2(%arg0: i32) -> (i32, i32) {
    %c0_i32 = arith.constant 0 : i32
    %c0_i32_0 = arith.constant 0 : i32
    return %arg0, %c0_i32 : i32, i32
  }
  func.func @transform_3(%arg0: i32) -> (i32, i32) {
    %c0_i32 = arith.constant 0 : i32
    %c0_i32_0 = arith.constant 0 : i32
    return %arg0, %c0_i32 : i32, i32
  }
  func.func @transform_4(%arg0: i32) -> (i32, i32) {
    %c0_i32 = arith.constant 0 : i32
    %c0_i32_0 = arith.constant 0 : i32
    return %arg0, %c0_i32 : i32, i32
  }
}

</mosaic_0001>

<llo_original>
// kernel: tpu_custom_call.1
$region0: #{tpu_custom_call.1}
  #allocation0 [shape = 'u32[]', space=smem, size = 0x4, offset = 0x4, fixed_abs, tag = 'smem constant byte address 0x4 - core index']
  #allocation1 [shape = 'u32[144,128]{1,0:T(1,128)}', space=vmem, size = 0x12000, scoped, tag = 'internal scratch']
  %s0 = inlined_call_operand.vmem [shape: s16[16,6], index: 0, kind: input, shape index: {}]
  %s1 = inlined_call_operand.vmem [shape: s16[16,6], index: 1, kind: input, shape index: {}]
  %s2 = inlined_call_operand.vmem [shape: s32[16,1], index: 2, kind: input, shape index: {}]
  %s3 = inlined_call_operand.vmem [shape: s16[16,6], index: 3, kind: output, shape index: {0}]
  %s4 = inlined_call_operand.vmem [shape: s16[16,6], index: 4, kind: output, shape index: {1}]
  %5 = xla_tuple %s3, %s4
  %s6 = sld [smem:[#allocation0]]
  $region30: #{tpu_custom_call.1} parent=0
    _
  %s8 = ssub.s32 1, %s6
  %s9 = scalar_select 0, %s8, %s6
  // Predicated region
  $region2: #{tpu_custom_call.1} parent=0 // pred_check
    _
  $region3: #{tpu_custom_call.1} parent=0 // pred_check_branch
    %11 = sbr.rel (0) target = $region5
  $region4: #{tpu_custom_call.1} parent=0 // pred_region
    _
  $region5: #{tpu_custom_call.1} parent=0 // pred_fallthru
    _
  // Predicated region
  $region6: #{tpu_custom_call.1} parent=0 // pred_check
    _
  $region7: #{tpu_custom_call.1} parent=0 // pred_check_branch
    %13 = sbr.rel (0) target = $region9
  $region8: #{tpu_custom_call.1} parent=0 // pred_region
    _
  $region9: #{tpu_custom_call.1} parent=0 // pred_fallthru
    _
  // Predicated region
  $region10: #{tpu_custom_call.1} parent=0 // pred_check
    _
  $region11: #{tpu_custom_call.1} parent=0 // pred_check_branch
    %15 = sbr.rel (0) target = $region13
  $region12: #{tpu_custom_call.1} parent=0 // pred_region
    _
  $region13: #{tpu_custom_call.1} parent=0 // pred_fallthru
    _
  %v16 = vld [vmem:[%s0] sm:$0xf]
  %v17 = vld [vmem:[%s0 + $0x4] sm:$0xf]
  %v18 = vunpack.c.l.b16 %v16
  %v19 = vunpack.c.l.b16 %v17
  %v20 = vld [vmem:[%s1] sm:$0xf]
  %v21 = vld [vmem:[%s1 + $0x4] sm:$0xf]
  %v22 = vunpack.c.l.b16 %v20
  %v23 = vunpack.c.l.b16 %v21
  %v24 = vld [vmem:[%s2] sm:$0xff]
  %v25 = vld [vmem:[%s2 + $0x8] sm:$0xff]
  %v26 = vlaneseq
  %v27 = vand.u32 %v26, 127
  %vm28 = vcmp.eq.s32.totalorder %v27, 0
  %29 = vset.pattern.permute.xlu0 0
  %30 = vperm.xlu0 %29, %v24
  %v31 = vpop.permute.xlu0 %30
  %32 = vset.pattern.permute.xlu0 0
  %33 = vperm.xlu0 %32, %v25
  %v34 = vpop.permute.xlu0 %33
  %vm35 = vcmp.le.s32.totalorder %v27, %v31
  %vm36 = vcmp.le.s32.totalorder %v27, %v34
  %v37 = vsel %vm35, %v22, 0
  %v38 = vsel %vm36, %v23, 0
  %v39 = vsel %vm28, 1, %v37
  %v40 = vsel %vm28, 1, %v38
  %v41 = vsub.s32 %v24, 1
  %v42 = vsub.s32 %v25, 1
  %43 = vset.pattern.permute.xlu0 0
  %44 = vperm.xlu0 %43, %v41
  %v45 = vpop.permute.xlu0 %44
  %46 = vset.pattern.permute.xlu0 0
  %47 = vperm.xlu0 %46, %v42
  %v48 = vpop.permute.xlu0 %47
  %vm49 = vcmp.lt.s32.totalorder %v27, %v45
  %vm50 = vcmp.lt.s32.totalorder %v27, %v48
  %vm51 = vcmp.eq.s32.totalorder %v27, %v45
  %vm52 = vcmp.eq.s32.totalorder %v27, %v48
  %v53 = vsel %vm51, 1, 0
  %v54 = vsel %vm52, 1, 0
  %v55 = vsel %vm49, %v18, %v53
  %v56 = vsel %vm50, %v19, %v54
  %v57 = vpack.c.b16 %v39, %v39
  %v58 = vpack.c.b16 %v40, %v40
  %vm59 = vcmask 44032
  %60 = vst.msk [vmem:[%s3] sm:$0xf] %vm59, %v57
  %61 = vst.msk [vmem:[%s3 + $0x4] sm:$0xf] %vm59, %v58
  %v62 = vpack.c.b16 %v55, %v55
  %v63 = vpack.c.b16 %v56, %v56
  %64 = vst.msk [vmem:[%s4] sm:$0xf] %vm59, %v62
  %65 = vst.msk [vmem:[%s4 + $0x4] sm:$0xf] %vm59, %v63
  // Predicated region
  $region14: #{tpu_custom_call.1} parent=0 // pred_check
    _
  $region15: #{tpu_custom_call.1} parent=0 // pred_check_branch
    %67 = sbr.rel (0) target = $region17
  $region16: #{tpu_custom_call.1} parent=0 // pred_region
    _
  $region17: #{tpu_custom_call.1} parent=0 // pred_fallthru
    _
  // Predicated region
  $region18: #{tpu_custom_call.1} parent=0 // pred_check
    _
  $region19: #{tpu_custom_call.1} parent=0 // pred_check_branch
    %69 = sbr.rel (0) target = $region21
  $region20: #{tpu_custom_call.1} parent=0 // pred_region
    _
  $region21: #{tpu_custom_call.1} parent=0 // pred_fallthru
    _
  // Predicated region
  $region22: #{tpu_custom_call.1} parent=0 // pred_check
    _
  $region23: #{tpu_custom_call.1} parent=0 // pred_check_branch
    %71 = sbr.rel (0) target = $region25
  $region24: #{tpu_custom_call.1} parent=0 // pred_region
    _
  $region25: #{tpu_custom_call.1} parent=0 // pred_fallthru
    _
  // Predicated region
  $region26: #{tpu_custom_call.1} parent=0 // pred_check
    _
  $region27: #{tpu_custom_call.1} parent=0 // pred_check_branch
    %73 = sbr.rel (0) target = $region29
  $region28: #{tpu_custom_call.1} parent=0 // pred_region
    _
  $region29: #{tpu_custom_call.1} parent=0 // pred_fallthru
    _

</llo_original>
